<compile_context>
chip_gen: v5e
topology: v5e:2x2
jax: 0.10.0
libtpu: 0.0.40
codegen_flags: <defaults>
</compile_context>

<pallas_src>
import functools

import numpy as np
import jax
import jax.numpy as jnp
from jax.experimental import pallas as pl
from jax.experimental.pallas import tpu as pltpu


# -----------------------------------------------------------------------------
# Pallas kernel: whole SAM forward in one invocation (no grid).
# -----------------------------------------------------------------------------
def _sam_kernel(x1_ref, x2_ref, par_ref, o1_ref, o2_ref, *, hw):
    # x1_ref, x2_ref : (B, C, HW)       activations, f32
    # par_ref        : (3, HWp, HWp)    [cabA, cabB, (W1-W2)^T], zero-padded
    # o1_ref, o2_ref : (B, C, HW)       outputs
    x1 = x1_ref[...]                                   # (B, C, HW)
    x2 = x2_ref[...]

    # channel sums (the 1/C of torch.mean is folded into cabA/cabB)
    d1 = jnp.sum(x1, axis=1)                           # (B, HW)
    d2 = jnp.sum(x2, axis=1)                           # (B, HW)

    # conv(2->1, 7x7, pad=3) + ReLU as two tile-aligned MXU matmuls
    # (static sublane slice :hw of the padded parameter tiles; K = HW = 49).
    cab_a = par_ref[0, :hw, :]                         # (HW, HWp)
    cab_b = par_ref[1, :hw, :]                         # (HW, HWp)
    g = jnp.maximum(
        jnp.dot(d1, cab_a, preferred_element_type=jnp.float32)
        + jnp.dot(d2, cab_b, preferred_element_type=jnp.float32),
        0.0)                                           # (B, HWp), cols >= hw are 0

    # softmax over {trans1(g), trans2(g)} == sigmoid(g @ (W1 - W2)^T)
    logit = jnp.dot(g, par_ref[2],
                    preferred_element_type=jnp.float32)[:, :hw]     # (B, HW)
    # exp -> EUP; approx reciprocal -> EUP slot (keeps the VALU free for blend)
    w_self = pl.reciprocal(1.0 + jnp.exp(-logit), approx=True)[:, None, :]

    # blend:  out1 = w*x1 + (1-w)*x2 = x2 + w*(x1-x2)
    #         out2 = w*x2 + (1-w)*x1 = x1 - w*(x1-x2)
    wdiff = w_self * (x1 - x2)                         # (B, C, HW)
    o1_ref[...] = jnp.maximum(x2 + wdiff, 0.0)
    o2_ref[...] = jnp.maximum(x1 - wdiff, 0.0)


# -----------------------------------------------------------------------------
# Host-side parameter folding (numpy, run once; keep outside jit).
# -----------------------------------------------------------------------------
def _fold_params(conv_w, lin1_w, lin2_w, c, h, w, pad, hwp):
    """Fold Conv2d(2->1, kxk, pad, no bias) over the fixed h x w grid and the
    1/C of the channel mean into two (HW, HW) matrices, and the two Linear
    layers + softmax into one (HW, HW) matrix; zero-pad all three to
    (hwp, hwp) and stack into a single (3, hwp, hwp) parameter tensor."""
    conv_w = np.asarray(conv_w, np.float32)
    _, cin, kh, kw = conv_w.shape
    hw = h * w
    m = np.zeros((cin, hw, hw), np.float32)
    for i in range(h):
        for j in range(w):
            q = i * w + j                               # output position
            for ki in range(kh):
                for kj in range(kw):
                    ii, jj = i + ki - pad, j + kj - pad
                    if 0 <= ii < h and 0 <= jj < w:
                        p = ii * w + jj                 # input position
                        for s in range(cin):
                            m[s, p, q] += conv_w[0, s, ki, kj]
    m /= np.float32(c)                                  # fold mean's 1/C
    wd = (np.asarray(lin1_w, np.float32)
          - np.asarray(lin2_w, np.float32)).T           # (HW, HW)

    params = np.zeros((3, hwp, hwp), np.float32)
    params[0, :hw, :hw] = m[0]
    params[1, :hw, :hw] = m[1]
    params[2, :hw, :hw] = wd
    return params


# -----------------------------------------------------------------------------
# Wrapper.
# -----------------------------------------------------------------------------
def afa_layer_sam_data_pallas(x1, x2, conv_w, lin1_w, lin2_w, *, pad=3):
    """x1, x2: (B, C, H, W) float32.  Returns (out1, out2), same shape."""
    b, c, h, w = x1.shape
    hw = h * w
    hwp = max(128, -(-hw // 128) * 128)                 # lane-dense param tiles

    # ---- parameter folding (concrete weights; precompute once in real use) --
    params = _fold_params(conv_w, lin1_w, lin2_w, c, h, w, pad, hwp)

    # free reshapes (contiguous collapse of the trailing dims); no stack/pad
    x1f = x1.reshape(b, c, hw).astype(jnp.float32)
    x2f = x2.reshape(b, c, hw).astype(jnp.float32)

    # ---- VMEM-budget guard (v5e scoped default 16 MiB; v7x physical 64 MiB) -
    work_bytes = (4 * b * c * hw + params.size) * 4
    compiler_params = None
    if work_bytes > (12 << 20):
        # TODO(synk): at these sizes prefer a tiled grid over B*C with
        # dimension_semantics=("parallel",) instead of a bigger VMEM limit.
        compiler_params = pltpu.CompilerParams(
            vmem_limit_bytes=min(2 * work_bytes, 48 << 20))

    vmem = pl.BlockSpec(memory_space=pltpu.MemorySpace.VMEM)
    out1, out2 = pl.pallas_call(
        functools.partial(_sam_kernel, hw=hw),
        out_shape=(jax.ShapeDtypeStruct((b, c, hw), jnp.float32),
                   jax.ShapeDtypeStruct((b, c, hw), jnp.float32)),
        in_specs=[vmem, vmem, vmem],
        out_specs=(vmem, vmem),
        compiler_params=compiler_params,
    )(x1f, x2f, jnp.asarray(params))

    return out1.reshape(b, c, h, w), out2.reshape(b, c, h, w)


# -----------------------------------------------------------------------------
# Pure-JAX reference (mirrors the PyTorch forward) for verification.
# -----------------------------------------------------------------------------
def _reference(x1, x2, conv_w, lin1_w, lin2_w, *, pad=3):
    b, c, h, w = x1.shape
    d_a = jnp.mean(x1, axis=1, keepdims=True)
    d_b = jnp.mean(x2, axis=1, keepdims=True)
    d = jnp.concatenate([d_a, d_b], axis=1)
    g = jax.lax.conv_general_dilated(
        d, conv_w, window_strides=(1, 1), padding=[(pad, pad), (pad, pad)],
        dimension_numbers=("NCHW", "OIHW", "NCHW"))
    g = jax.nn.relu(g)
    gv = g.reshape(b, -1)
    g1 = gv @ lin1_w.T
    g2 = gv @ lin2_w.T
    ws = jax.nn.softmax(jnp.stack([g1, g2], axis=1), axis=1)
    w_self = ws[:, 0].reshape(b, 1, h, w)
    w_other = ws[:, 1].reshape(b, 1, h, w)
    o1 = w_self * x1 + w_other * x2
    o2 = w_self * x2 + w_other * x1
    return jax.nn.relu(o1), jax.nn.relu(o2)


if __name__ == "__main__":
    # Module constraint: Linear in_features = h*w with h=w=7, so spatial is 7x7.
    B, C, H, W = 2, 4, 7, 7
    HW = H * W

    key = jax.random.PRNGKey(0)
    k1, k2, k3, k4, k5 = jax.random.split(key, 5)

    x1 = jax.random.normal(k1, (B, C, H, W), dtype=jnp.float32)
    x2 = jax.random.normal(k2, (B, C, H, W), dtype=jnp.float32)

    # Deterministic synthetic parameters (shapes from the module __init__,
    # all bias=False as in the PyTorch spec).
    conv_w = 0.05 * jax.random.normal(k3, (1, 2, 7, 7), dtype=jnp.float32)
    lin1_w = 0.1 * jax.random.normal(k4, (HW, HW), dtype=jnp.float32)
    lin2_w = 0.1 * jax.random.normal(k5, (HW, HW), dtype=jnp.float32)

    out1, out2 = afa_layer_sam_data_pallas(x1, x2, conv_w, lin1_w, lin2_w)
    jax.block_until_ready((out1, out2))

    ref1, ref2 = _reference(x1, x2, conv_w, lin1_w, lin2_w)
    # Tolerance headroom is solely for the EUP approx-reciprocal in the
    # sigmoid (pl.reciprocal(..., approx=True)); with approx=False the kernel
    # matches the reference to ~1e-6.
    np.testing.assert_allclose(np.asarray(out1), np.asarray(ref1),
                               rtol=5e-3, atol=5e-3)
    np.testing.assert_allclose(np.asarray(out2), np.asarray(ref2),
                               rtol=5e-3, atol=5e-3)

    print("KERNEL_OK")
</pallas_src>

<mosaic_0001>
module attributes {stable_mosaic.version = 11 : i64} {
  func.func @_sam_kernel(%arg0: memref<2x4x49xf32, #tpu.memory_space<vmem>>, %arg1: memref<2x4x49xf32, #tpu.memory_space<vmem>>, %arg2: memref<3x128x128xf32, #tpu.memory_space<vmem>>, %arg3: memref<2x4x49xf32, #tpu.memory_space<vmem>>, %arg4: memref<2x4x49xf32, #tpu.memory_space<vmem>>) attributes {dimension_semantics = [], scalar_prefetch = 0 : i64, scratch_operands = 0 : i64, tpu.core_type = #tpu.core_type<tc>} {
    %c0 = arith.constant 0 : index
    %c0_0 = arith.constant 0 : index
    %c0_1 = arith.constant 0 : index
    %0 = vector.load %arg0[%c0, %c0_0, %c0_1] : memref<2x4x49xf32, #tpu.memory_space<vmem>>, vector<2x4x49xf32>
    %c0_2 = arith.constant 0 : index
    %c0_3 = arith.constant 0 : index
    %c0_4 = arith.constant 0 : index
    %1 = vector.load %arg1[%c0_2, %c0_3, %c0_4] : memref<2x4x49xf32, #tpu.memory_space<vmem>>, vector<2x4x49xf32>
    %cst = arith.constant dense<0.000000e+00> : vector<2x49xf32>
    %2 = vector.multi_reduction <add>, %0, %cst [1] : vector<2x4x49xf32> to vector<2x49xf32>
    %cst_5 = arith.constant dense<0.000000e+00> : vector<2x49xf32>
    %3 = vector.multi_reduction <add>, %1, %cst_5 [1] : vector<2x4x49xf32> to vector<2x49xf32>
    %c0_6 = arith.constant 0 : index
    %c0_7 = arith.constant 0 : index
    %c0_8 = arith.constant 0 : index
    %4 = vector.load %arg2[%c0_6, %c0_7, %c0_8] : memref<3x128x128xf32, #tpu.memory_space<vmem>>, vector<1x49x128xf32>
    %5 = vector.shape_cast %4 : vector<1x49x128xf32> to vector<49x128xf32>
    %c1 = arith.constant 1 : index
    %c0_9 = arith.constant 0 : index
    %c0_10 = arith.constant 0 : index
    %6 = vector.load %arg2[%c1, %c0_9, %c0_10] : memref<3x128x128xf32, #tpu.memory_space<vmem>>, vector<1x49x128xf32>
    %7 = vector.shape_cast %6 : vector<1x49x128xf32> to vector<49x128xf32>
    %cst_11 = arith.constant dense<0.000000e+00> : vector<2x128xf32>
    %8 = tpu.matmul %2, %5, %cst_11 {dimension_numbers = #tpu.dot_dimension_numbers<[1], [0], [0], [1], [0, 0, 1, 1], [], []>} : vector<2x49xf32>, vector<49x128xf32>, vector<2x128xf32> -> vector<2x128xf32>
    %cst_12 = arith.constant dense<0.000000e+00> : vector<2x128xf32>
    %9 = tpu.matmul %3, %7, %cst_12 {dimension_numbers = #tpu.dot_dimension_numbers<[1], [0], [0], [1], [0, 0, 1, 1], [], []>} : vector<2x49xf32>, vector<49x128xf32>, vector<2x128xf32> -> vector<2x128xf32>
    %10 = arith.addf %8, %9 : vector<2x128xf32>
    %cst_13 = arith.constant 0.000000e+00 : f32
    %11 = vector.broadcast %cst_13 : f32 to vector<2x128xf32>
    %12 = arith.maximumf %10, %11 : vector<2x128xf32>
    %c2 = arith.constant 2 : index
    %c0_14 = arith.constant 0 : index
    %c0_15 = arith.constant 0 : index
    %13 = vector.load %arg2[%c2, %c0_14, %c0_15] : memref<3x128x128xf32, #tpu.memory_space<vmem>>, vector<1x128x128xf32>
    %14 = vector.shape_cast %13 : vector<1x128x128xf32> to vector<128x128xf32>
    %cst_16 = arith.constant dense<0.000000e+00> : vector<2x128xf32>
    %15 = tpu.matmul %12, %14, %cst_16 {dimension_numbers = #tpu.dot_dimension_numbers<[1], [0], [0], [1], [0, 0, 1, 1], [], []>} : vector<2x128xf32>, vector<128x128xf32>, vector<2x128xf32> -> vector<2x128xf32>
    %16 = vector.extract_strided_slice %15 {offsets = [0, 0], sizes = [2, 49], strides = [1, 1]} : vector<2x128xf32> to vector<2x49xf32>
    %cst_17 = arith.constant 0.000000e+00 : f32
    %17 = vector.broadcast %cst_17 : f32 to vector<2x49xf32>
    %18 = arith.subf %17, %16 : vector<2x49xf32>
    %19 = math.exp %18 : vector<2x49xf32>
    %cst_18 = arith.constant 1.000000e+00 : f32
    %20 = vector.broadcast %cst_18 : f32 to vector<2x49xf32>
    %21 = arith.addf %20, %19 : vector<2x49xf32>
    %22 = tpu.reciprocal %21 {approx = true} : vector<2x49xf32> -> vector<2x49xf32>
    %23 = vector.shape_cast %22 : vector<2x49xf32> to vector<2x1x49xf32>
    %24 = arith.subf %0, %1 : vector<2x4x49xf32>
    %25 = vector.broadcast %23 : vector<2x1x49xf32> to vector<2x4x49xf32>
    %26 = arith.mulf %25, %24 : vector<2x4x49xf32>
    %27 = arith.addf %1, %26 : vector<2x4x49xf32>
    %cst_19 = arith.constant 0.000000e+00 : f32
    %28 = vector.broadcast %cst_19 : f32 to vector<2x4x49xf32>
    %29 = arith.maximumf %27, %28 : vector<2x4x49xf32>
    %c0_20 = arith.constant 0 : index
    %c0_21 = arith.constant 0 : index
    %c0_22 = arith.constant 0 : index
    %30 = vector.load %arg3[%c0_20, %c0_21, %c0_22] : memref<2x4x49xf32, #tpu.memory_space<vmem>>, vector<2x4x49xf32>
    tpu.vector_store %arg3[%c0_20, %c0_21, %c0_22], %29 {strides = array<i32>} : memref<2x4x49xf32, #tpu.memory_space<vmem>>, vector<2x4x49xf32>,
    %31 = arith.subf %0, %26 : vector<2x4x49xf32>
    %cst_23 = arith.constant 0.000000e+00 : f32
    %32 = vector.broadcast %cst_23 : f32 to vector<2x4x49xf32>
    %33 = arith.maximumf %31, %32 : vector<2x4x49xf32>
    %c0_24 = arith.constant 0 : index
    %c0_25 = arith.constant 0 : index
    %c0_26 = arith.constant 0 : index
    %34 = vector.load %arg4[%c0_24, %c0_25, %c0_26] : memref<2x4x49xf32, #tpu.memory_space<vmem>>, vector<2x4x49xf32>
    tpu.vector_store %arg4[%c0_24, %c0_25, %c0_26], %33 {strides = array<i32>} : memref<2x4x49xf32, #tpu.memory_space<vmem>>, vector<2x4x49xf32>,
    return
  }
}

</mosaic_0001>

<llo_original>
// kernel: tpu_custom_call.1
$region0: #{tpu_custom_call.1}
  #allocation0 [shape = 'u32[]', space=smem, size = 0x4, offset = 0x4, fixed_abs, tag = 'smem constant byte address 0x4 - core index']
  #allocation1 [shape = 'u32[72,128]{1,0:T(1,128)}', space=vmem, size = 0x9000, scoped, tag = 'internal scratch']
  %s0 = inlined_call_operand.hbm [shape: f32[2,4,49], index: 0, kind: input, shape index: {}]
  %s1 = inlined_call_operand.hbm [shape: f32[2,4,49], index: 1, kind: input, shape index: {}]
  %s2 = inlined_call_operand.hbm [shape: f32[3,128,128], index: 2, kind: input, shape index: {}]
  %s3 = inlined_call_operand.hbm [shape: f32[2,4,49], index: 3, kind: output, shape index: {0}]
  %s4 = inlined_call_operand.hbm [shape: f32[2,4,49], index: 4, kind: output, shape index: {1}]
  %5 = xla_tuple %s3, %s4
  %s6 = sld [smem:[#allocation0]]
  $region42: #{tpu_custom_call.1} parent=0
    _
  %s8 = ssub.s32 1, %s6
  %s9 = scalar_select 0, %s8, %s6
  $region1: #{tpu_custom_call.1} parent=0
    #allocation2 [shape = 'u8[4096]{0}', space=vmem, size = 0x1000, scoped, tag = 'input window, operand 0, single buffered']
    #allocation3 [shape = 's32[1]{0}', space=sflag, size = 0x4, scoped, tag = 'scoped memory for tpu_custom_call.1']
    #allocation4 [shape = 's32[1]{0}', space=sflag, size = 0x4, scoped, tag = 'scoped memory for tpu_custom_call.1']
    #allocation5 [shape = 'u8[4096]{0}', space=vmem, size = 0x1000, scoped, tag = 'input window, operand 1, single buffered']
    #allocation6 [shape = 's32[1]{0}', space=sflag, size = 0x4, scoped, tag = 'scoped memory for tpu_custom_call.1']
    #allocation7 [shape = 'u8[196608]{0}', space=vmem, size = 0x30000, scoped, tag = 'input window, operand 2, single buffered']
    #allocation8 [shape = 'u8[4096]{0}', space=vmem, size = 0x1000, scoped, tag = 'output window, operand 0, single buffered']
    #allocation9 [shape = 'u8[4096]{0}', space=vmem, size = 0x1000, scoped, tag = 'output window, operand 1, single buffered']
    #allocation10 [shape = 's32[1]{0}', space=sflag, size = 0x4, scoped, tag = 'scoped memory for tpu_custom_call.1']
    %10 = vsyncpa [#allocation3], 0
    %11 = vsyncpa [#allocation6], 0
    %12 = vsyncpa [#allocation4], 0
    %13 = vsyncpa [#allocation10], 0
    // Predicated region
    $region2: #{tpu_custom_call.1} parent=1 // pred_check
      _
    $region3: #{tpu_custom_call.1} parent=1 // pred_check_branch
      %15 = sbr.rel (0) target = $region5
    $region4: #{tpu_custom_call.1} parent=1 // pred_region
      %17 = vsyncadd [#allocation3], 0
      %s18 = sshll.u32 %s0, 4
      %s19 = int_to_ptr.hbm [resolvable:$true] %s18
      %s20 = sshll.u32 [#allocation2], 4
      %s21 = int_to_ptr.vmem [resolvable:$true] %s20
      %26 = dma.hbm_to_vmem [thread:$0]  %s19, 128, %s21, [#allocation3], 64, 64, 4
    $region5: #{tpu_custom_call.1} parent=1 // pred_fallthru
      _
    // Predicated region
    $region6: #{tpu_custom_call.1} parent=1 // pred_check
      _
    $region7: #{tpu_custom_call.1} parent=1 // pred_check_branch
      %28 = sbr.rel (0) target = $region9
    $region8: #{tpu_custom_call.1} parent=1 // pred_region
      %30 = vsyncadd [#allocation6], 0
      %s31 = sshll.u32 %s1, 4
      %s32 = int_to_ptr.hbm [resolvable:$true] %s31
      %s33 = sshll.u32 [#allocation5], 4
      %s34 = int_to_ptr.vmem [resolvable:$true] %s33
      %39 = dma.hbm_to_vmem [thread:$0]  %s32, 128, %s34, [#allocation6], 64, 64, 4
    $region9: #{tpu_custom_call.1} parent=1 // pred_fallthru
      _
    // Predicated region
    $region10: #{tpu_custom_call.1} parent=1 // pred_check
      _
    $region11: #{tpu_custom_call.1} parent=1 // pred_check_branch
      %41 = sbr.rel (0) target = $region13
    $region12: #{tpu_custom_call.1} parent=1 // pred_region
      %43 = vsyncadd [#allocation6], 0
      %s44 = sshll.u32 %s2, 4
      %s45 = int_to_ptr.hbm [resolvable:$true] %s44
      %s46 = sshll.u32 [#allocation7], 4
      %s47 = int_to_ptr.vmem [resolvable:$true] %s46
      %52 = dma.hbm_to_vmem [thread:$0]  %s45, 6144, %s47, [#allocation6], 128, 128, 8
    $region13: #{tpu_custom_call.1} parent=1 // pred_fallthru
      _
    // Predicated region
    $region14: #{tpu_custom_call.1} parent=1 // pred_check
      _
    $region15: #{tpu_custom_call.1} parent=1 // pred_check_branch
      %54 = sbr.rel (0) target = $region17
    $region16: #{tpu_custom_call.1} parent=1 // pred_region
      %56 = dma.done [#allocation3], 128
    $region17: #{tpu_custom_call.1} parent=1 // pred_fallthru
      _
    // Predicated region
    $region18: #{tpu_custom_call.1} parent=1 // pred_check
      _
    $region19: #{tpu_custom_call.1} parent=1 // pred_check_branch
      %58 = sbr.rel (0) target = $region21
    $region20: #{tpu_custom_call.1} parent=1 // pred_region
      %60 = dma.done [#allocation6], 128
    $region21: #{tpu_custom_call.1} parent=1 // pred_fallthru
      _
    // Predicated region
    $region22: #{tpu_custom_call.1} parent=1 // pred_check
      _
    $region23: #{tpu_custom_call.1} parent=1 // pred_check_branch
      %62 = sbr.rel (0) target = $region25
    $region24: #{tpu_custom_call.1} parent=1 // pred_region
      %64 = dma.done [#allocation6], 6144
    $region25: #{tpu_custom_call.1} parent=1 // pred_fallthru
      _
    %v65 = vld [vmem:[#allocation2] sm:$0xf]
    %v66 = vld [vmem:[#allocation2 + $0x4] sm:$0xf]
    %v67 = vld [vmem:[#allocation5] sm:$0xf]
    %v68 = vld [vmem:[#allocation5 + $0x4] sm:$0xf]
    %vm69 = vcmask 396288
    %v70 = vsel %vm69, %v65, 0.0
    %v71 = vrot.slane %v70, 4
    %v72 = vadd.f32 %v70, %v71
    %v73 = vrot.slane %v72, 2
    %v74 = vadd.f32 %v72, %v73
    %v75 = vrot.slane %v74, 1
    %v76 = vadd.f32 %v74, %v75
    %v77 = vsel %vm69, %v66, 0.0
    %v78 = vrot.slane %v77, 4
    %v79 = vadd.f32 %v77, %v78
    %v80 = vrot.slane %v79, 2
    %v81 = vadd.f32 %v79, %v80
    %v82 = vrot.slane %v81, 1
    %v83 = vadd.f32 %v81, %v82
    %v84 = vsel %vm69, %v67, 0.0
    %v85 = vrot.slane %v84, 4
    %v86 = vadd.f32 %v84, %v85
    %v87 = vrot.slane %v86, 2
    %v88 = vadd.f32 %v86, %v87
    %v89 = vrot.slane %v88, 1
    %v90 = vadd.f32 %v88, %v89
    %v91 = vsel %vm69, %v68, 0.0
    %v92 = vrot.slane %v91, 4
    %v93 = vadd.f32 %v91, %v92
    %v94 = vrot.slane %v93, 2
    %v95 = vadd.f32 %v93, %v94
    %v96 = vrot.slane %v95, 1
    %v97 = vadd.f32 %v95, %v96
    %v98 = vld [vmem:[#allocation7] sm:$0xff]
    %v99 = vld [vmem:[#allocation7 + $0x8] sm:$0xff]
    %v100 = vld [vmem:[#allocation7 + $0x10] sm:$0xff]
    %v101 = vld [vmem:[#allocation7 + $0x18] sm:$0xff]
    %v102 = vld [vmem:[#allocation7 + $0x20] sm:$0xff]
    %v103 = vld [vmem:[#allocation7 + $0x28] sm:$0xff]
    %v104 = vld [vmem:[#allocation7 + $0x30] sm:$0x1]
    %s105 = scalar_lea.vmem [#allocation7], 128
    %v106 = vld [vmem:[%s105] sm:$0xff]
    %v107 = vld [vmem:[%s105 + $0x8] sm:$0xff]
    %v108 = vld [vmem:[%s105 + $0x10] sm:$0xff]
    %v109 = vld [vmem:[%s105 + $0x18] sm:$0xff]
    %v110 = vld [vmem:[%s105 + $0x20] sm:$0xff]
    %v111 = vld [vmem:[%s105 + $0x28] sm:$0xff]
    %v112 = vld [vmem:[%s105 + $0x30] sm:$0x1]
    %vm115 = vcmask 1041409
    %v116 = vsel %vm115, %v97, %v90
    %vm117 = vcmask 400384
    %v118 = vsel %vm117, %v116, 0
    %vm120 = vcmask 1040384
    %v122 = vsel %vm120, %v112, 0
    %124 = vmatpush.msra.mxu0 0.0
    %125 = vmatpush.msra.mxu0 0.0
    %126 = vmatpush.msra.mxu0 0.0
    %127 = vmatpush.msra.mxu0 0.0
    %128 = vmatpush.msra.mxu0 0.0
    %129 = vmatpush.msra.mxu0 0.0
    %130 = vmatpush.msra.mxu0 0.0
    %131 = vmatpush.msra.mxu0 0.0
    %132 = vmatpush.msra.mxu0 0.0
    %133 = vmatpush.msra.mxu0 %v122
    %134 = vmatpush.msra.mxu0 %v111
    %135 = vmatpush.msra.mxu0 %v110
    %136 = vmatpush.msra.mxu0 %v109
    %137 = vmatpush.msra.mxu0 %v108
    %138 = vmatpush.msra.mxu0 %v107
    %139 = vmatpush.msra.mxu0 %v106
    %140 = vmatmul.f32.gmra.mxu0 %v118
    %v141 = vpop.f32.mrf.mxu0
    %v142 = vadd.f32 0.0, %v141
    %143 = vdwg.mxu0
    %v146 = vsel %vm115, %v83, %v76
    %v147 = vsel %vm117, %v146, 0
    %v150 = vsel %vm120, %v104, 0
    %152 = vmatpush.msra.mxu0 0.0
    %153 = vmatpush.msra.mxu0 0.0
    %154 = vmatpush.msra.mxu0 0.0
    %155 = vmatpush.msra.mxu0 0.0
    %156 = vmatpush.msra.mxu0 0.0
    %157 = vmatpush.msra.mxu0 0.0
    %158 = vmatpush.msra.mxu0 0.0
    %159 = vmatpush.msra.mxu0 0.0
    %160 = vmatpush.msra.mxu0 0.0
    %161 = vmatpush.msra.mxu0 %v150
    %162 = vmatpush.msra.mxu0 %v103
    %163 = vmatpush.msra.mxu0 %v102
    %164 = vmatpush.msra.mxu0 %v101
    %165 = vmatpush.msra.mxu0 %v100
    %166 = vmatpush.msra.mxu0 %v99
    %167 = vmatpush.msra.mxu0 %v98
    %168 = vmatmul.f32.gmra.mxu0 %v147
    %v169 = vpop.f32.mrf.mxu0
    %v170 = vadd.f32 %v142, %v169
    %171 = vdwg.mxu0
    %v172 = vmax.f32 %v170, 0.0
    %s173 = scalar_lea.vmem [#allocation7], 256
    %v174 = vld [vmem:[%s173] sm:$0xff]
    %v175 = vld [vmem:[%s173 + $0x8] sm:$0xff]
    %v176 = vld [vmem:[%s173 + $0x10] sm:$0xff]
    %v177 = vld [vmem:[%s173 + $0x18] sm:$0xff]
    %v178 = vld [vmem:[%s173 + $0x20] sm:$0xff]
    %v179 = vld [vmem:[%s173 + $0x28] sm:$0xff]
    %v180 = vld [vmem:[%s173 + $0x30] sm:$0xff]
    %v181 = vld [vmem:[%s173 + $0x38] sm:$0xff]
    %v182 = vld [vmem:[%s173 + $0x40] sm:$0xff]
    %v183 = vld [vmem:[%s173 + $0x48] sm:$0xff]
    %v184 = vld [vmem:[%s173 + $0x50] sm:$0xff]
    %v185 = vld [vmem:[%s173 + $0x58] sm:$0xff]
    %v186 = vld [vmem:[%s173 + $0x60] sm:$0xff]
    %v187 = vld [vmem:[%s173 + $0x68] sm:$0xff]
    %v188 = vld [vmem:[%s173 + $0x70] sm:$0xff]
    %v189 = vld [vmem:[%s173 + $0x78] sm:$0xff]
    %190 = vmatpush.msra.mxu0 %v189
    %191 = vmatpush.msra.mxu0 %v188
    %192 = vmatpush.msra.mxu0 %v187
    %193 = vmatpush.msra.mxu0 %v186
    %194 = vmatpush.msra.mxu0 %v185
    %195 = vmatpush.msra.mxu0 %v184
    %196 = vmatpush.msra.mxu0 %v183
    %197 = vmatpush.msra.mxu0 %v182
    %198 = vmatpush.msra.mxu0 %v181
    %199 = vmatpush.msra.mxu0 %v180
    %200 = vmatpush.msra.mxu0 %v179
    %201 = vmatpush.msra.mxu0 %v178
    %202 = vmatpush.msra.mxu0 %v177
    %203 = vmatpush.msra.mxu0 %v176
    %204 = vmatpush.msra.mxu0 %v175
    %205 = vmatpush.msra.mxu0 %v174
    %206 = vmatmul.f32.gmra.mxu0 %v172
    %v207 = vpop.f32.mrf.mxu0
    %v208 = vadd.f32 0.0, %v207
    %209 = vdwg.mxu0
    %v210 = vsub.f32 0.0, %v208
    %v211 = vmul.f32 %v210, 1.442695
    %v212 = vpow.pop %v211
    %v213 = vadd.f32 %v212, 1.0
    %v214 = vrcp.pop %v213
    %v216 = vrot.slane %v214, 1
    %v217 = vsub.f32 %v65, %v67
    %v218 = vsub.f32 %v66, %v68
    %v219 = vperm.slane %v214, 0
    %v220 = vperm.slane %v216, 0
    %v223 = vmul.f32 %v219, %v217
    %v224 = vmul.f32 %v220, %v218
    %v225 = vadd.f32 %v67, %v223
    %v226 = vadd.f32 %v68, %v224
    %v227 = vmax.f32 %v225, 0.0
    %v228 = vmax.f32 %v226, 0.0
    %229 = vst.msk [vmem:[#allocation8] sm:$0xf] %vm69, %v227
    %230 = vst.msk [vmem:[#allocation8 + $0x4] sm:$0xf] %vm69, %v228
    %v231 = vsub.f32 %v65, %v223
    %v232 = vsub.f32 %v66, %v224
    %v233 = vmax.f32 %v231, 0.0
    %v234 = vmax.f32 %v232, 0.0
    %235 = vst.msk [vmem:[#allocation9] sm:$0xf] %vm69, %v233
    %236 = vst.msk [vmem:[#allocation9 + $0x4] sm:$0xf] %vm69, %v234
    // Predicated region
    $region26: #{tpu_custom_call.1} parent=1 // pred_check
      _
    $region27: #{tpu_custom_call.1} parent=1 // pred_check_branch
      %238 = sbr.rel (0) target = $region29
    $region28: #{tpu_custom_call.1} parent=1 // pred_region
      %240 = vsyncadd [#allocation4], 0
      %s241 = sshll.u32 [#allocation8], 4
      %s242 = int_to_ptr.vmem [resolvable:$true] %s241
      %s243 = sshll.u32 %s3, 4
      %s244 = int_to_ptr.hbm [resolvable:$true] %s243
      %249 = dma.vmem_to_hbm [thread:$0]  %s242, 128, %s244, [#allocation4], 64, 64, 4
    $region29: #{tpu_custom_call.1} parent=1 // pred_fallthru
      _
    // Predicated region
    $region30: #{tpu_custom_call.1} parent=1 // pred_check
      _
    $region31: #{tpu_custom_call.1} parent=1 // pred_check_branch
      %251 = sbr.rel (0) target = $region33
    $region32: #{tpu_custom_call.1} parent=1 // pred_region
      %253 = vsyncadd [#allocation10], 0
      %s254 = sshll.u32 [#allocation9], 4
      %s255 = int_to_ptr.vmem [resolvable:$true] %s254
      %s256 = sshll.u32 %s4, 4
      %s257 = int_to_ptr.hbm [resolvable:$true] %s256
      %262 = dma.vmem_to_hbm [thread:$0]  %s255, 128, %s257, [#allocation10], 64, 64, 4
    $region33: #{tpu_custom_call.1} parent=1 // pred_fallthru
      _
    // Predicated region
    $region34: #{tpu_custom_call.1} parent=1 // pred_check
      _
    $region35: #{tpu_custom_call.1} parent=1 // pred_check_branch
      %264 = sbr.rel (0) target = $region37
    $region36: #{tpu_custom_call.1} parent=1 // pred_region
      %266 = dma.done [#allocation4], 128
    $region37: #{tpu_custom_call.1} parent=1 // pred_fallthru
      _
    // Predicated region
    $region38: #{tpu_custom_call.1} parent=1 // pred_check
      _
    $region39: #{tpu_custom_call.1} parent=1 // pred_check_branch
      %268 = sbr.rel (0) target = $region41
    $region40: #{tpu_custom_call.1} parent=1 // pred_region
      %270 = dma.done [#allocation10], 128
    $region41: #{tpu_custom_call.1} parent=1 // pred_fallthru
      _
    %271 = vsyncpa [#allocation3], 1
    %272 = vsyncpa [#allocation6], 1
    %273 = vsyncpa [#allocation4], 1
    %274 = vsyncpa [#allocation10], 1

</llo_original>
